<compile_context>
chip_gen: v6e
topology: v6e:2x2x1
jax: 0.10.0
libtpu: 0.0.40
codegen_flags: <defaults>
</compile_context>

<pallas_src>
from functools import partial

import numpy as np
import jax
import jax.numpy as jnp
from jax.experimental import pallas as pl
from jax.experimental.pallas import tpu as pltpu


def _round_up(x, m):
    return ((x + m - 1) // m) * m


# -----------------------------------------------------------------------------
# Kernel, class_token_position == 'end': three direct slice stores, no compute.
# -----------------------------------------------------------------------------
def _prompt_end_kernel(prefix_ref, ctx_ref, suffix_ref, out_ref):
    Bc, _, D = out_ref.shape
    n_ctx = ctx_ref.shape[0]
    out_ref[:, 0:1, :] = prefix_ref[...]
    out_ref[:, 1:1 + n_ctx, :] = jnp.broadcast_to(ctx_ref[...][None, :, :],
                                                  (Bc, n_ctx, D))
    out_ref[:, 1 + n_ctx:, :] = suffix_ref[...]


# -----------------------------------------------------------------------------
# Kernel, 'middle' / 'front': code-table driven selects.
#   code == r (0..n_ctx-1)  -> ctx row r
#   code == n_ctx           -> suffix row (p - shift_a)   (stage A)
#   code == n_ctx + 1       -> suffix row (p - shift_b)   (stage B)
#   position 0 is always overwritten by the prefix slice store.
# -----------------------------------------------------------------------------
def _prompt_mf_kernel(code_ref, prefix_ref, ctx_ref, suffix_ref, out_ref,
                      stage_a, stage_b, *, shift_a, shift_b):
    Bc, seq, D = out_ref.shape
    n_ctx = ctx_ref.shape[0]
    n_suf = suffix_ref.shape[1]
    A_CODE = n_ctx
    B_CODE = n_ctx + 1

    suffix = suffix_ref[...]                          # (Bc, n_suf, D)
    # Stage the two class-independent positional shifts of the suffix.  Rows of
    # the scratch outside the staged slices stay stale/uninitialized, but the
    # code table guarantees they are never selected (asserted host-side).
    stage_a[:, shift_a:shift_a + n_suf, :] = suffix
    stage_b[:, shift_b:shift_b + n_suf, :] = suffix

    code = code_ref[...]                              # (Bc, seq, 1) int32, pre-shaped
    composed = jnp.where(code == A_CODE, stage_a[...], stage_b[...])

    ctx = ctx_ref[...]                                # (n_ctx, D), VMEM-resident
    for r in range(n_ctx):                            # n_ctx is tiny (4): unrolled
        row = jnp.broadcast_to(ctx[r:r + 1, :][None, :, :], (Bc, seq, D))
        composed = jnp.where(code == r, row, composed)

    out_ref[...] = composed                           # one lane/sublane-dense store
    out_ref[:, 0:1, :] = prefix_ref[...]              # single 1-sublane slice store


# -----------------------------------------------------------------------------
# Static glue: per-(class, position) code table built from name_lens.
# -----------------------------------------------------------------------------
def _build_code_table(name_lens, n_ctx, n_suf, position):
    seq = 1 + n_ctx + n_suf
    half = n_ctx // 2
    n_cls = len(name_lens)
    A, B = n_ctx, n_ctx + 1
    shift_a = {"middle": 1 + half, "front": 1}[position]
    shift_b = 1 + n_ctx
    code = np.zeros((n_cls, seq), np.int32)           # default 0 -> ctx row 0
    for c, L in enumerate(name_lens):
        L = int(L)
        assert 0 <= L <= n_suf, f"name_lens[{c}]={L} exceeds suffix length {n_suf}"
        if position == "middle":
            order = ([0]
                     + list(range(half))
                     + [A] * L
                     + list(range(half, n_ctx))
                     + [B] * (n_suf - L))
        elif position == "front":
            order = ([0]
                     + [A] * L
                     + list(range(n_ctx))
                     + [B] * (n_suf - L))
        else:
            raise ValueError(position)
        assert len(order) == seq
        code[c] = order
    # Invariant that makes the un-initialized scratch rows safe: A/B codes only
    # appear at positions covered by the corresponding staged slice.
    pos_idx = np.arange(seq)[None, :]
    assert np.all((code != A) | ((pos_idx >= shift_a) & (pos_idx < shift_a + n_suf)))
    assert np.all((code != B) | (pos_idx >= shift_b))
    return code, shift_a, shift_b


def _pick_block_classes(n_cls, target):
    """Largest class-block <= target dividing n_cls (avoids per-call padding);
    fall back to `target` + padding only when n_cls has no usable divisor."""
    if n_cls <= target:
        return n_cls
    best = 1
    for d in range(1, target + 1):
        if n_cls % d == 0:
            best = d
    return best if best >= max(2, target // 4) else target


# -----------------------------------------------------------------------------
# Wrapper (the PromptLearner.forward equivalent)
# -----------------------------------------------------------------------------
def prompt_learner_forward(ctx, token_prefix, token_suffix, name_lens,
                           class_token_position, *, block_classes=32):
    n_cls, _, D = token_prefix.shape
    n_ctx = ctx.shape[0]
    n_suf = token_suffix.shape[1]
    seq = 1 + n_ctx + n_suf
    dtype = ctx.dtype
    pos = class_token_position

    bc = _pick_block_classes(n_cls, block_classes)
    pad = (-n_cls) % bc
    n_pad = n_cls + pad
    if pad:
        # TODO(synk): hoist these padded copies to module init (shapes/name_lens
        # are static) so the memory-bound forward never pays an extra pad pass.
        token_prefix = jnp.pad(token_prefix, ((0, pad), (0, 0), (0, 0)))
        token_suffix = jnp.pad(token_suffix, ((0, pad), (0, 0), (0, 0)))

    itemsize = jnp.dtype(dtype).itemsize
    grid = (n_pad // bc,)

    data_specs = [
        pl.BlockSpec((bc, 1, D), lambda i: (i, 0, 0)),       # prefix (SOS)
        pl.BlockSpec((n_ctx, D), lambda i: (0, 0)),          # ctx (grid-invariant)
        pl.BlockSpec((bc, n_suf, D), lambda i: (i, 0, 0)),   # suffix
    ]
    out_spec = pl.BlockSpec((bc, seq, D), lambda i: (i, 0, 0))

    bytes_accessed = (n_pad * seq * D                        # output
                      + n_pad * (1 + n_suf) * D              # prefix + suffix
                      + n_ctx * D) * itemsize                # ctx (stays resident)

    if pos == "end":
        kernel = _prompt_end_kernel
        in_specs = data_specs
        inputs = (token_prefix, ctx, token_suffix)
        scratch_shapes = []
        scratch_bytes = 0
        table_vmem = 0
    elif pos in ("middle", "front"):
        code_np, shift_a, shift_b = _build_code_table(name_lens, n_ctx, n_suf, pos)
        if pad:
            code_np = np.pad(code_np, ((0, pad), (0, 0)))
        code = jnp.asarray(code_np[:, :, None])              # (n_pad, seq, 1) int32
        kernel = partial(_prompt_mf_kernel, shift_a=shift_a, shift_b=shift_b)
        in_specs = [pl.BlockSpec((bc, seq, 1), lambda i: (i, 0, 0))] + data_specs
        inputs = (code, token_prefix, ctx, token_suffix)
        scratch_shapes = [pltpu.VMEM((bc, seq, D), dtype),    # stage A
                          pltpu.VMEM((bc, seq, D), dtype)]    # stage B
        scratch_bytes = 2 * bc * seq * D * itemsize
        table_vmem = bc * _round_up(seq, 8) * 128 * 4         # tiled int32 table
        bytes_accessed += n_pad * seq * 4
    else:
        raise ValueError(pos)

    # Explicit scoped-VMEM budget: 2x (double-buffered) blocks + scratch + slack,
    # clamped to stay inside v7x's 64 MiB physical VMEM.
    blk_bytes = (bc * seq * D + bc * (1 + n_suf) * D + n_ctx * D) * itemsize + table_vmem
    vmem_limit = int(min(max(2 * blk_bytes + scratch_bytes + (4 << 20), 32 << 20),
                         64 << 20))

    out = pl.pallas_call(
        kernel,
        out_shape=jax.ShapeDtypeStruct((n_pad, seq, D), dtype),
        grid_spec=pltpu.PrefetchScalarGridSpec(
            num_scalar_prefetch=0,
            grid=grid,
            in_specs=in_specs,
            out_specs=out_spec,
            scratch_shapes=scratch_shapes),
        compiler_params=pltpu.CompilerParams(
            # Class axis is embarrassingly parallel; on v7x verify this shards
            # across both TensorCores (switch to CORE_PARALLEL if one TC idles).
            dimension_semantics=("parallel",),
            vmem_limit_bytes=vmem_limit),
        cost_estimate=pl.CostEstimate(flops=0, transcendentals=0,
                                      bytes_accessed=int(bytes_accessed)),
    )(*inputs)
    return out[:n_cls] if pad else out


# -----------------------------------------------------------------------------
# Pure-JAX reference (mirrors the PyTorch forward exactly)
# -----------------------------------------------------------------------------
def prompt_learner_reference(ctx, prefix, suffix, name_lens, position):
    n_cls = prefix.shape[0]
    n_ctx = ctx.shape[0]
    ctx_e = jnp.broadcast_to(ctx[None], (n_cls,) + ctx.shape)
    if position == "end":
        return jnp.concatenate([prefix, ctx_e, suffix], axis=1)
    half = n_ctx // 2
    prompts = []
    for i in range(n_cls):
        L = int(name_lens[i])
        prefix_i = prefix[i:i + 1]
        class_i = suffix[i:i + 1, :L]
        suffix_i = suffix[i:i + 1, L:]
        if position == "middle":
            prompt = jnp.concatenate(
                [prefix_i, ctx_e[i:i + 1, :half], class_i,
                 ctx_e[i:i + 1, half:], suffix_i], axis=1)
        elif position == "front":
            prompt = jnp.concatenate(
                [prefix_i, class_i, ctx_e[i:i + 1], suffix_i], axis=1)
        else:
            raise ValueError(position)
        prompts.append(prompt)
    return jnp.concatenate(prompts, axis=0)


# -----------------------------------------------------------------------------
# Main
# -----------------------------------------------------------------------------
if __name__ == "__main__":
    # TODO(synk): the real module builds token_prefix/token_suffix from the CLIP
    # tokenizer + clip_model.token_embedding; here they are deterministic random
    # stand-ins of the same shape (that lookup is host-side preprocessing).
    configs = [
        # single grid step (bc = n_cls)
        dict(n_cls=3, n_ctx=4, D=128, seq=16, name_lens=[1, 2, 3],
             dtype=jnp.float32, block_classes=32),
        # divisor-picked blocking (bc=6 -> 2 grid steps), bf16
        dict(n_cls=12, n_ctx=4, D=128, seq=16,
             name_lens=[1, 2, 3, 4, 5, 6, 7, 1, 2, 3, 4, 5],
             dtype=jnp.bfloat16, block_classes=8),
        # padding fallback path (bc=4, n_pad=8 -> 2 grid steps)
        dict(n_cls=5, n_ctx=4, D=128, seq=16, name_lens=[2, 4, 6, 8, 3],
             dtype=jnp.float32, block_classes=4),
    ]

    key = jax.random.PRNGKey(0)
    ok = True
    for cfg in configs:
        n_cls, n_ctx, D, seq = cfg["n_cls"], cfg["n_ctx"], cfg["D"], cfg["seq"]
        name_lens, dtype = cfg["name_lens"], cfg["dtype"]
        n_suf = seq - 1 - n_ctx

        key, k_ctx, k_emb = jax.random.split(key, 3)
        # nn.init.normal_(ctx_vectors, std=0.02) -> generic (n_ctx, D) context
        ctx = (0.02 * jax.random.normal(k_ctx, (n_ctx, D))).astype(dtype)
        embedding = jax.random.normal(k_emb, (n_cls, seq, D)).astype(dtype)
        token_prefix = embedding[:, :1, :]            # SOS
        token_suffix = embedding[:, 1 + n_ctx:, :]    # class tokens, EOS, padding

        for pos_name in ("end", "middle", "front"):
            out = prompt_learner_forward(ctx, token_prefix, token_suffix,
                                         name_lens, pos_name,
                                         block_classes=cfg["block_classes"])
            out = jax.block_until_ready(out)
            ref = prompt_learner_reference(ctx, token_prefix, token_suffix,
                                           name_lens, pos_name)
            if out.shape != (n_cls, seq, D):
                ok = False
            if not bool(jnp.array_equal(out, ref)):
                ok = False

    print("KERNEL_OK" if ok else "KERNEL_MISMATCH")
</pallas_src>

<mosaic_0001>
module attributes {stable_mosaic.version = 11 : i64} {
  func.func @_prompt_end_kernel(%arg0: i32, %arg1: memref<3x1x128xf32, #tpu.memory_space<vmem>>, %arg2: memref<4x128xf32, #tpu.memory_space<vmem>>, %arg3: memref<3x11x128xf32, #tpu.memory_space<vmem>>, %arg4: memref<3x16x128xf32, #tpu.memory_space<vmem>>) attributes {dimension_semantics = [#tpu.dimension_semantics<parallel>], iteration_bounds = array<i64: 1>, scalar_prefetch = 0 : i64, scratch_operands = 0 : i64, tpu.core_type = #tpu.core_type<tc>, window_params = [{transform_indices = @transform_0, window_bounds = array<i64: 3, 1, 128>}, {pipeline_mode = #tpu.pipeline_mode<synchronous>, transform_indices = @transform_1, window_bounds = array<i64: 4, 128>}, {transform_indices = @transform_2, window_bounds = array<i64: 3, 11, 128>}, {transform_indices = @transform_3, window_bounds = array<i64: 3, 16, 128>}]} {
    %c0 = arith.constant 0 : index
    %c0_0 = arith.constant 0 : index
    %c0_1 = arith.constant 0 : index
    %0 = vector.load %arg1[%c0, %c0_0, %c0_1] : memref<3x1x128xf32, #tpu.memory_space<vmem>>, vector<3x1x128xf32>
    %c0_2 = arith.constant 0 : index
    %c0_3 = arith.constant 0 : index
    %c0_4 = arith.constant 0 : index
    %1 = vector.load %arg4[%c0_2, %c0_3, %c0_4] : memref<3x16x128xf32, #tpu.memory_space<vmem>>, vector<3x1x128xf32>
    tpu.vector_store %arg4[%c0_2, %c0_3, %c0_4], %0 {strides = array<i32>} : memref<3x16x128xf32, #tpu.memory_space<vmem>>, vector<3x1x128xf32>,
    %c0_5 = arith.constant 0 : index
    %c0_6 = arith.constant 0 : index
    %2 = vector.load %arg2[%c0_5, %c0_6] : memref<4x128xf32, #tpu.memory_space<vmem>>, vector<4x128xf32>
    %3 = vector.shape_cast %2 : vector<4x128xf32> to vector<1x4x128xf32>
    %4 = vector.shape_cast %3 : vector<1x4x128xf32> to vector<1x4x128xf32>
    %5 = vector.broadcast %4 : vector<1x4x128xf32> to vector<3x4x128xf32>
    %c0_7 = arith.constant 0 : index
    %c1 = arith.constant 1 : index
    %c0_8 = arith.constant 0 : index
    %6 = vector.load %arg4[%c0_7, %c1, %c0_8] : memref<3x16x128xf32, #tpu.memory_space<vmem>>, vector<3x4x128xf32>
    tpu.vector_store %arg4[%c0_7, %c1, %c0_8], %5 {strides = array<i32>} : memref<3x16x128xf32, #tpu.memory_space<vmem>>, vector<3x4x128xf32>,
    %c0_9 = arith.constant 0 : index
    %c0_10 = arith.constant 0 : index
    %c0_11 = arith.constant 0 : index
    %7 = vector.load %arg3[%c0_9, %c0_10, %c0_11] : memref<3x11x128xf32, #tpu.memory_space<vmem>>, vector<3x11x128xf32>
    %c0_12 = arith.constant 0 : index
    %c5 = arith.constant 5 : index
    %c0_13 = arith.constant 0 : index
    %8 = vector.load %arg4[%c0_12, %c5, %c0_13] : memref<3x16x128xf32, #tpu.memory_space<vmem>>, vector<3x11x128xf32>
    tpu.vector_store %arg4[%c0_12, %c5, %c0_13], %7 {strides = array<i32>} : memref<3x16x128xf32, #tpu.memory_space<vmem>>, vector<3x11x128xf32>,
    return
  }
  func.func @transform_0(%arg0: i32) -> (i32, i32, i32) {
    %c0_i32 = arith.constant 0 : i32
    %c0_i32_0 = arith.constant 0 : i32
    %c0_i32_1 = arith.constant 0 : i32
    return %arg0, %c0_i32, %c0_i32_0 : i32, i32, i32
  }
  func.func @transform_1(%arg0: i32) -> (i32, i32) {
    %c0_i32 = arith.constant 0 : i32
    %c0_i32_0 = arith.constant 0 : i32
    %c0_i32_1 = arith.constant 0 : i32
    return %c0_i32, %c0_i32_0 : i32, i32
  }
  func.func @transform_2(%arg0: i32) -> (i32, i32, i32) {
    %c0_i32 = arith.constant 0 : i32
    %c0_i32_0 = arith.constant 0 : i32
    %c0_i32_1 = arith.constant 0 : i32
    return %arg0, %c0_i32, %c0_i32_0 : i32, i32, i32
  }
  func.func @transform_3(%arg0: i32) -> (i32, i32, i32) {
    %c0_i32 = arith.constant 0 : i32
    %c0_i32_0 = arith.constant 0 : i32
    %c0_i32_1 = arith.constant 0 : i32
    return %arg0, %c0_i32, %c0_i32_0 : i32, i32, i32
  }
}

</mosaic_0001>

<llo_original>
// kernel: tpu_custom_call.1
$region0: #{tpu_custom_call.1}
  #allocation0 [shape = 'u32[]', space=smem, size = 0x4, offset = 0x4, fixed_abs, tag = 'smem constant byte address 0x4 - core index']
  #allocation1 [shape = 'u32[144,128]{1,0:T(1,128)}', space=vmem, size = 0x12000, scoped, tag = 'internal scratch']
  %s0 = inlined_call_operand.vmem [shape: f32[3,1,128], index: 0, kind: input, shape index: {}]
  %s1 = inlined_call_operand.vmem [shape: f32[4,128], index: 1, kind: input, shape index: {}]
  %s2 = inlined_call_operand.vmem [shape: f32[3,11,128], index: 2, kind: input, shape index: {}]
  %s3 = inlined_call_operand.hbm [shape: f32[3,16,128], index: 3, kind: output, shape index: {}]
  %s4 = sld [smem:[#allocation0]]
  $region22: #{tpu_custom_call.1} parent=0
    _
  %s6 = ssub.s32 1, %s4
  %s7 = scalar_select 0, %s6, %s4
  $region1: #{tpu_custom_call.1} parent=0
    #allocation2 [shape = 'u8[24576]{0}', space=vmem, size = 0x6000, scoped, tag = 'output window, operand 0, single buffered']
    #allocation3 [shape = 's32[1]{0}', space=sflag, size = 0x4, scoped, tag = 'scoped memory for tpu_custom_call.1']
    %8 = vsyncpa [#allocation3], 0
    // Predicated region
    $region2: #{tpu_custom_call.1} parent=1 // pred_check
      _
    $region3: #{tpu_custom_call.1} parent=1 // pred_check_branch
      %10 = sbr.rel (0) target = $region5
    $region4: #{tpu_custom_call.1} parent=1 // pred_region
      _
    $region5: #{tpu_custom_call.1} parent=1 // pred_fallthru
      _
    // Predicated region
    $region6: #{tpu_custom_call.1} parent=1 // pred_check
      _
    $region7: #{tpu_custom_call.1} parent=1 // pred_check_branch
      %12 = sbr.rel (0) target = $region9
    $region8: #{tpu_custom_call.1} parent=1 // pred_region
      _
    $region9: #{tpu_custom_call.1} parent=1 // pred_fallthru
      _
    // Predicated region
    $region10: #{tpu_custom_call.1} parent=1 // pred_check
      _
    $region11: #{tpu_custom_call.1} parent=1 // pred_check_branch
      %14 = sbr.rel (0) target = $region13
    $region12: #{tpu_custom_call.1} parent=1 // pred_region
      _
    $region13: #{tpu_custom_call.1} parent=1 // pred_fallthru
      _
    %v15 = vld [vmem:[%s0] sm:$0x1]
    %v16 = vld [vmem:[%s0 + $0x1] sm:$0x1]
    %v17 = vld [vmem:[%s0 + $0x2] sm:$0x1]
    %18 = vst [vmem:[#allocation2] sm:$0x1] %v15
    %19 = vst [vmem:[#allocation2 + $0x10] sm:$0x1] %v16
    %20 = vst [vmem:[#allocation2 + $0x20] sm:$0x1] %v17
    %v21 = vld [vmem:[%s1] sm:$0xf]
    %22 = vst [vmem:[#allocation2 + $0x1] sm:$0xf] %v21
    %23 = vst [vmem:[#allocation2 + $0x11] sm:$0xf] %v21
    %24 = vst [vmem:[#allocation2 + $0x21] sm:$0xf] %v21
    %v25 = vld [vmem:[%s2] sm:$0xff]
    %v26 = vld [vmem:[%s2 + $0x8] sm:$0x7]
    %v27 = vld [vmem:[%s2 + $0x10] sm:$0xff]
    %v28 = vld [vmem:[%s2 + $0x18] sm:$0x7]
    %v29 = vld [vmem:[%s2 + $0x20] sm:$0xff]
    %v30 = vld [vmem:[%s2 + $0x28] sm:$0x7]
    %31 = vst [vmem:[#allocation2 + $0x5] sm:$0xff] %v25
    %32 = vst [vmem:[#allocation2 + $0xd] sm:$0x7] %v26
    %33 = vst [vmem:[#allocation2 + $0x15] sm:$0xff] %v27
    %34 = vst [vmem:[#allocation2 + $0x1d] sm:$0x7] %v28
    %35 = vst [vmem:[#allocation2 + $0x25] sm:$0xff] %v29
    %36 = vst [vmem:[#allocation2 + $0x2d] sm:$0x7] %v30
    // Predicated region
    $region14: #{tpu_custom_call.1} parent=1 // pred_check
      _
    $region15: #{tpu_custom_call.1} parent=1 // pred_check_branch
      %38 = sbr.rel (0) target = $region17
    $region16: #{tpu_custom_call.1} parent=1 // pred_region
      %s40 = ssub.s32 768, 768
      %41 = vsyncadd [#allocation3], %s40
      %s42 = sshll.u32 [#allocation2], 4
      %s43 = int_to_ptr.vmem [resolvable:$true] %s42
      %48 = dma.vmem_to_hbm [thread:$0]  %s43, 768, %s3, [#allocation3], 128, 128, 8
    $region17: #{tpu_custom_call.1} parent=1 // pred_fallthru
      _
    // Predicated region
    $region18: #{tpu_custom_call.1} parent=1 // pred_check
      _
    $region19: #{tpu_custom_call.1} parent=1 // pred_check_branch
      %50 = sbr.rel (0) target = $region21
    $region20: #{tpu_custom_call.1} parent=1 // pred_region
      %51 = dma.done [#allocation3], 768
    $region21: #{tpu_custom_call.1} parent=1 // pred_fallthru
      _
    %52 = vsyncpa [#allocation3], 1

</llo_original>
